<compile_context>
chip_gen: v5e
topology: v5e:2x2
jax: 0.10.0
libtpu: 0.0.40
codegen_flags: <defaults>
</compile_context>

<pallas_src>
import functools

import numpy as np
import jax
import jax.numpy as jnp
from jax.experimental import pallas as pl
from jax.experimental.pallas import tpu as pltpu

_F32_EPS = float(np.finfo(np.float32).eps)
_VMEM_LIMIT_BYTES = 32 * 1024 * 1024


@functools.lru_cache(maxsize=None)
def _tile_target_bytes():
    """Per-operand tile budget: 2 MiB default; 4 MiB on v7x (64 MiB VMEM, fast HBM)."""
    try:
        vmem = pltpu.get_tpu_info().vmem_capacity_bytes
    except Exception:
        return 2 * 1024 * 1024
    return 4 * 1024 * 1024 if vmem <= 64 * 1024 * 1024 else 2 * 1024 * 1024


def _rho_from_sq(sq, alpha, scale):
    """Barron general robust loss rho(d, alpha, scale) evaluated from sq = d**2.

    alpha/scale are compile-time Python scalars; any constant that is exactly
    1.0 (the module's init values alpha=1, scale=1) is skipped at trace time.
    """
    alpha = float(alpha)
    scale = float(scale)
    if alpha == 2.0:                                   # quadratic: 0.5 * (d / scale)^2
        c = 0.5 / (scale * scale)
        return sq * c if c != 1.0 else sq
    beta = max(_F32_EPS, abs(alpha - 2.0))
    alpha_safe = max(_F32_EPS, abs(alpha))
    if alpha < 0.0:
        alpha_safe = -alpha_safe
    c_in = 1.0 / (scale * scale * beta)                # folds (1/scale)^2 and 1/beta
    c_out = beta / alpha_safe
    s = sq * c_in if c_in != 1.0 else sq
    if alpha == 1.0:                                   # Charbonnier: sqrt(s + 1) - 1 (EUP)
        r = jnp.sqrt(s + 1.0) - 1.0
    else:
        # exp/log are the guaranteed Mosaic lowerings; for alpha -> 0 an
        # expm1/log1p form would avoid cancellation (default alpha=1 is exact).
        r = jnp.exp((0.5 * alpha) * jnp.log(s + 1.0)) - 1.0
    return r * c_out if c_out != 1.0 else r


# --------------------------------------------------------------------------- #
# Lane-dense flat path: unweighted, data viewed as (rows, 128).
# --------------------------------------------------------------------------- #
def _flat_sum_kernel(x_ref, t_ref, out_ref, *, alpha, scale, rows_total,
                     tile_rows, steps_per_chunk, first_masked_block,
                     mask_needed):
    ci = pl.program_id(0)        # "parallel" chunk axis (megacore split on v7x)
    ri = pl.program_id(1)        # "arbitrary" reduction axis within the chunk

    @pl.when(ri == 0)
    def _init():
        out_ref[...] = jnp.zeros_like(out_ref)

    x = x_ref[...].astype(jnp.float32)                 # (tile_rows, 128)
    t = t_ref[...].astype(jnp.float32)
    diff = x - t                                       # no abs(): rho uses d^2 only
    rho = _rho_from_sq(diff * diff, alpha, scale)

    def _accumulate(vals):
        # Sublane-aligned reshape + VPU adds fold the tile into the tiny
        # (1, 8, 128) output-resident accumulator; no cross-lane reduce here.
        out_ref[...] += vals.reshape(1, tile_rows // 8, 8, 128).sum(axis=1)

    if mask_needed:
        blk = ci * steps_per_chunk + ri                # unclamped block id

        @pl.when(blk < first_masked_block)
        def _clean():
            _accumulate(rho)

        @pl.when(blk >= first_masked_block)            # tail / phantom blocks only
        def _tail():
            row = jax.lax.broadcasted_iota(jnp.int32, rho.shape, 0)
            _accumulate(jnp.where(blk * tile_rows + row < rows_total, rho, 0.0))
    else:
        _accumulate(rho)


def _pick_tile_rows(rows_total, itemsize, target_bytes):
    tr = max(8, (target_bytes // (128 * itemsize)) // 8 * 8)
    if tr >= rows_total:
        return max(8, -(-rows_total // 8) * 8)         # single (maybe partial) block
    return tr


def _flat_path(x, t, alpha, scale, tile_rows):
    rows_total = x.size // 128
    x2 = x.reshape(rows_total, 128)                    # contiguous -> metadata-only
    t2 = t.reshape(rows_total, 128)
    if tile_rows is None:
        tile_rows = _pick_tile_rows(rows_total, jnp.dtype(x.dtype).itemsize,
                                    _tile_target_bytes())
    assert tile_rows % 8 == 0, tile_rows
    nblocks = pl.cdiv(rows_total, tile_rows)
    num_chunks = 2 if nblocks >= 2 else 1              # give the 2nd v7x TC work
    spc = pl.cdiv(nblocks, num_chunks)                 # reduction steps per chunk
    mask_needed = (rows_total % tile_rows != 0) or (num_chunks * spc != nblocks)
    first_masked = (rows_total // tile_rows) if rows_total % tile_rows else nblocks

    def in_map(c, r):
        # Clamp phantom steps of the last chunk onto the last real block; the
        # in-kernel row mask zeroes their contribution.
        return (jnp.minimum(c * spc + r, nblocks - 1), 0)

    kernel = functools.partial(
        _flat_sum_kernel, alpha=float(alpha), scale=float(scale),
        rows_total=rows_total, tile_rows=tile_rows, steps_per_chunk=spc,
        first_masked_block=first_masked, mask_needed=mask_needed)

    return pl.pallas_call(
        kernel,
        out_shape=jax.ShapeDtypeStruct((num_chunks, 8, 128), jnp.float32),
        grid_spec=pltpu.PrefetchScalarGridSpec(
            num_scalar_prefetch=0,
            grid=(num_chunks, spc),
            in_specs=[pl.BlockSpec((tile_rows, 128), in_map),
                      pl.BlockSpec((tile_rows, 128), in_map)],
            out_specs=pl.BlockSpec((1, 8, 128), lambda c, r: (c, 0, 0)),
        ),
        compiler_params=pltpu.CompilerParams(
            dimension_semantics=("parallel", "arbitrary"),
            vmem_limit_bytes=_VMEM_LIMIT_BYTES),
    )(x2, t2)


# --------------------------------------------------------------------------- #
# (N, H, W) path: weighted, or element count not a multiple of 128.
# --------------------------------------------------------------------------- #
def _nhw_sum_kernel(*refs, alpha, scale, h_total, tile_h, acc_rows,
                    has_weight, mask_needed):
    if has_weight:
        x_ref, t_ref, w2_ref, out_ref = refs
    else:
        x_ref, t_ref, out_ref = refs
    hj = pl.program_id(1)

    @pl.when(hj == 0)
    def _init():
        out_ref[...] = jnp.zeros_like(out_ref)

    x = x_ref[...].astype(jnp.float32)                 # (1, tile_h, W)
    t = t_ref[...].astype(jnp.float32)
    diff = x - t
    sq = diff * diff
    if has_weight:
        sq = sq * w2_ref[...].astype(jnp.float32)      # (1, 1, W); weight pre-squared
    rho = _rho_from_sq(sq, alpha, scale)
    w_dim = rho.shape[-1]

    def _accumulate(vals):
        if acc_rows == tile_h:                         # tile_h == H (single H step)
            out_ref[...] += vals
        else:
            out_ref[...] += vals.reshape(1, tile_h // 8, 8, w_dim).sum(axis=1)

    if mask_needed:
        last = pl.num_programs(1) - 1

        @pl.when(hj < last)
        def _clean():
            _accumulate(rho)

        @pl.when(hj == last)                           # only the tail H block is masked
        def _tail():
            row = jax.lax.broadcasted_iota(jnp.int32, rho.shape, 1)
            _accumulate(jnp.where(hj * tile_h + row < h_total, rho, 0.0))
    else:
        _accumulate(rho)


def _pick_tile_h(h, w, itemsize, target_bytes):
    th = max(1, target_bytes // max(1, w * itemsize))
    if th >= h:
        return h
    return max(8, (th // 8) * 8)


def _nhw_path(x, t, weight, alpha, scale, tile_h):
    n, h, w_dim = x.shape
    if tile_h is None:
        tile_h = _pick_tile_h(h, w_dim, jnp.dtype(x.dtype).itemsize,
                              _tile_target_bytes())
    assert tile_h % 8 == 0 or tile_h == h, tile_h
    n_h = pl.cdiv(h, tile_h)
    acc_rows = 8 if tile_h % 8 == 0 else tile_h
    mask_needed = (h % tile_h) != 0
    has_weight = weight is not None

    in_specs = [pl.BlockSpec((1, tile_h, w_dim), lambda i, j: (i, j, 0)),
                pl.BlockSpec((1, tile_h, w_dim), lambda i, j: (i, j, 0))]
    args = [x, t]                                      # native dtype; upcast in kernel
    if has_weight:
        assert weight.shape == (n, w_dim), (weight.shape, (n, w_dim))
        # (|d| * w)^2 == d^2 * w^2: pre-square the tiny (N, W) weight in the
        # wrapper so the kernel needs neither abs() nor sign handling.
        args.append((weight.astype(jnp.float32) ** 2).reshape(n, 1, w_dim))
        in_specs.append(pl.BlockSpec((1, 1, w_dim), lambda i, j: (i, 0, 0)))

    kernel = functools.partial(
        _nhw_sum_kernel, alpha=float(alpha), scale=float(scale), h_total=h,
        tile_h=tile_h, acc_rows=acc_rows, has_weight=has_weight,
        mask_needed=mask_needed)

    return pl.pallas_call(
        kernel,
        out_shape=jax.ShapeDtypeStruct((n, acc_rows, w_dim), jnp.float32),
        grid_spec=pltpu.PrefetchScalarGridSpec(
            num_scalar_prefetch=0,
            grid=(n, n_h),
            in_specs=in_specs,
            out_specs=pl.BlockSpec((1, acc_rows, w_dim), lambda i, j: (i, 0, 0)),
        ),
        compiler_params=pltpu.CompilerParams(
            dimension_semantics=("parallel", "arbitrary"),
            vmem_limit_bytes=_VMEM_LIMIT_BYTES),
    )(*args)


# --------------------------------------------------------------------------- #
# Public wrapper (AdaptiveLoss.forward).
# --------------------------------------------------------------------------- #
def _pure_jax_loss(x, t, weight, alpha, scale):
    sq = (x.astype(jnp.float32) - t.astype(jnp.float32)) ** 2
    if weight is not None:
        sq = sq * (weight.astype(jnp.float32) ** 2)[:, None, :]
    loss = jnp.mean(_rho_from_sq(sq, alpha, scale))
    if scale != 1.0:
        loss = loss + float(np.log(scale))
    return loss


def adaptive_loss(_input, _target, weight=None, alpha=1.0, scale=1.0,
                  tile_h=None, tile_rows=None, min_pallas_bytes=1 << 20):
    """AdaptiveLoss.forward: mean adaptive robust NLL of |input - target| (* weight)."""
    x, t = _input, _target
    if x.shape != t.shape:
        # torch: _input.permute(0, 2, 3, 1).squeeze()  (NCHW with C == 1).
        # Dropping the channel axis is elementwise identical and metadata-only
        # (no transposed copy of the input materialized in HBM).
        assert x.ndim == 4 and x.shape[1] == 1, (x.shape, t.shape)
        x = jnp.squeeze(x, axis=1)
    if x.ndim == 2:
        x = x[None]
    if t.ndim == 2:
        t = t[None]
    if weight is not None and weight.ndim == 1:
        weight = weight[None]
    assert x.shape == t.shape, (x.shape, t.shape)
    assert x.ndim == 3, x.shape
    n, h, w_dim = x.shape
    total = n * h * w_dim

    # Tiny inputs: pallas_call launch + ~0.35us/step overhead dominates; let XLA fuse.
    if total * jnp.dtype(x.dtype).itemsize < min_pallas_bytes:
        return _pure_jax_loss(x, t, weight, alpha, scale)

    if weight is None and total % 128 == 0:
        partials = _flat_path(x, t, alpha, scale, tile_rows)
    else:
        partials = _nhw_path(x, t, weight, alpha, scale, tile_h)

    loss = jnp.sum(partials) / float(total)
    if scale != 1.0:
        loss = loss + float(np.log(scale))
    # TODO(synk): AdaptiveLossFunction.lossfun (nllfun) also adds
    # log_base_partition_function(alpha), a cubic spline over precomputed
    # partition_spline.npz data; for fixed alpha it is an additive constant and
    # is omitted here (requires external data not available in-script).
    return loss


def _reference_loss(_input, _target, weight, alpha=1.0, scale=1.0):
    """Independent pure-JAX reference (abs + jnp.power formulation)."""
    x, t = _input, _target
    if x.shape != t.shape:
        x = jnp.squeeze(jnp.transpose(x, (0, 2, 3, 1)))
    if x.ndim == 2:
        x = x[None]
    if t.ndim == 2:
        t = t[None]
    d = jnp.abs(x.astype(jnp.float32) - t.astype(jnp.float32))
    if weight is not None:
        d = d * weight.astype(jnp.float32)[:, None, :]
    d = d.reshape(-1)
    s = (d / scale) ** 2
    beta = max(_F32_EPS, abs(alpha - 2.0))
    alpha_safe = max(_F32_EPS, abs(alpha))
    if alpha < 0.0:
        alpha_safe = -alpha_safe
    base = s / beta + 1.0
    rho = (beta / alpha_safe) * (jnp.power(base, 0.5 * alpha) - 1.0)
    return jnp.mean(rho) + float(np.log(scale))


if __name__ == "__main__":
    key = jax.random.PRNGKey(0)
    k1, k2, k3, k4, k5 = jax.random.split(key, 5)

    # 1) shape-mismatch branch (NCHW, C==1) + per-column weight -> (N,H,W) kernel,
    #    multi-step H grid with a masked tail block (H=60 not a multiple of 16).
    N, C, H, W = 2, 1, 60, 96
    pred = jax.random.normal(k1, (N, C, H, W), dtype=jnp.float32)
    target = jax.random.normal(k2, (N, H, W), dtype=jnp.float32)
    weight = jax.random.uniform(k3, (N, W), dtype=jnp.float32, minval=0.5, maxval=1.5)

    loss_w = jax.block_until_ready(
        adaptive_loss(pred, target, weight, tile_h=16, min_pallas_bytes=0))
    ref_w = _reference_loss(pred, target, weight)
    assert jnp.allclose(loss_w, ref_w, rtol=1e-5, atol=1e-5), (loss_w, ref_w)

    # 2) same-shape, unweighted, N*H*W % 128 == 0 -> lane-dense flat kernel with a
    #    2-way parallel chunk split and a masked tail row block.
    loss_f = jax.block_until_ready(
        adaptive_loss(pred[:, 0], target, None, tile_rows=16, min_pallas_bytes=0))
    ref_f = _reference_loss(pred[:, 0], target, None)
    assert jnp.allclose(loss_f, ref_f, rtol=1e-5, atol=1e-5), (loss_f, ref_f)

    # 3) non-default alpha/scale through the flat kernel (generic exp/log branch).
    loss_a = jax.block_until_ready(
        adaptive_loss(pred[:, 0], target, None, alpha=0.5, scale=2.0,
                      tile_rows=24, min_pallas_bytes=0))
    ref_a = _reference_loss(pred[:, 0], target, None, alpha=0.5, scale=2.0)
    assert jnp.allclose(loss_a, ref_a, rtol=1e-5, atol=1e-5), (loss_a, ref_a)

    # 4) unweighted but N*H*W not a multiple of 128 -> (N,H,W) fallback path.
    x4 = jax.random.normal(k4, (2, 60, 40), dtype=jnp.float32)
    t4 = jax.random.normal(k5, (2, 60, 40), dtype=jnp.float32)
    loss_4 = jax.block_until_ready(adaptive_loss(x4, t4, None, min_pallas_bytes=0))
    ref_4 = _reference_loss(x4, t4, None)
    assert jnp.allclose(loss_4, ref_4, rtol=1e-5, atol=1e-5), (loss_4, ref_4)

    # 5) tiny-input auto fallback (pure JAX, no pallas_call).
    loss_s = jax.block_until_ready(adaptive_loss(pred, target, weight))
    assert jnp.allclose(loss_s, ref_w, rtol=1e-5, atol=1e-5), (loss_s, ref_w)

    print("KERNEL_OK")
</pallas_src>

<mosaic_0001>
module attributes {stable_mosaic.version = 11 : i64} {
  func.func @_nhw_sum_kernel(%arg0: i32, %arg1: i32, %arg2: memref<1x16x96xf32, #tpu.memory_space<vmem>>, %arg3: memref<1x16x96xf32, #tpu.memory_space<vmem>>, %arg4: memref<1x1x96xf32, #tpu.memory_space<vmem>>, %arg5: memref<1x8x96xf32, #tpu.memory_space<vmem>>) attributes {dimension_semantics = [#tpu.dimension_semantics<parallel>, #tpu.dimension_semantics<arbitrary>], iteration_bounds = array<i64: 2, 4>, scalar_prefetch = 0 : i64, scratch_operands = 0 : i64, tpu.core_type = #tpu.core_type<tc>, window_params = [{transform_indices = @transform_0, window_bounds = array<i64: 1, 16, 96>}, {transform_indices = @transform_1, window_bounds = array<i64: 1, 16, 96>}, {transform_indices = @transform_2, window_bounds = array<i64: 1, 1, 96>}, {transform_indices = @transform_3, window_bounds = array<i64: 1, 8, 96>}]} {
    %c0_i32 = arith.constant 0 : i32
    %0 = arith.cmpi eq, %arg1, %c0_i32 : i32
    %1 = arith.extui %0 : i1 to i32
    %c0_i32_0 = arith.constant 0 : i32
    %2 = arith.cmpi ne, %1, %c0_i32_0 : i32
    scf.if %2 {
      %cst_13 = arith.constant 0.000000e+00 : f32
      %21 = vector.broadcast %cst_13 : f32 to vector<1x8x96xf32>
      %c0_14 = arith.constant 0 : index
      %c0_15 = arith.constant 0 : index
      %c0_16 = arith.constant 0 : index
      %22 = vector.load %arg5[%c0_14, %c0_15, %c0_16] : memref<1x8x96xf32, #tpu.memory_space<vmem>>, vector<1x8x96xf32>
      tpu.vector_store %arg5[%c0_14, %c0_15, %c0_16], %21 {strides = array<i32>} : memref<1x8x96xf32, #tpu.memory_space<vmem>>, vector<1x8x96xf32>,
    } else {
    }
    %c0 = arith.constant 0 : index
    %c0_1 = arith.constant 0 : index
    %c0_2 = arith.constant 0 : index
    %3 = vector.load %arg2[%c0, %c0_1, %c0_2] : memref<1x16x96xf32, #tpu.memory_space<vmem>>, vector<1x16x96xf32>
    %c0_3 = arith.constant 0 : index
    %c0_4 = arith.constant 0 : index
    %c0_5 = arith.constant 0 : index
    %4 = vector.load %arg3[%c0_3, %c0_4, %c0_5] : memref<1x16x96xf32, #tpu.memory_space<vmem>>, vector<1x16x96xf32>
    %5 = arith.subf %3, %4 : vector<1x16x96xf32>
    %6 = arith.mulf %5, %5 : vector<1x16x96xf32>
    %c0_6 = arith.constant 0 : index
    %c0_7 = arith.constant 0 : index
    %c0_8 = arith.constant 0 : index
    %7 = vector.load %arg4[%c0_6, %c0_7, %c0_8] : memref<1x1x96xf32, #tpu.memory_space<vmem>>, vector<1x1x96xf32>
    %8 = vector.broadcast %7 : vector<1x1x96xf32> to vector<1x16x96xf32>
    %9 = arith.mulf %6, %8 : vector<1x16x96xf32>
    %cst = arith.constant 1.000000e+00 : f32
    %10 = vector.broadcast %cst : f32 to vector<1x16x96xf32>
    %11 = arith.addf %9, %10 : vector<1x16x96xf32>
    %12 = math.sqrt %11 : vector<1x16x96xf32>
    %cst_9 = arith.constant 1.000000e+00 : f32
    %13 = vector.broadcast %cst_9 : f32 to vector<1x16x96xf32>
    %14 = arith.subf %12, %13 : vector<1x16x96xf32>
    %c3_i32 = arith.constant 3 : i32
    %15 = arith.cmpi slt, %arg1, %c3_i32 : i32
    %16 = arith.extui %15 : i1 to i32
    %c0_i32_10 = arith.constant 0 : i32
    %17 = arith.cmpi ne, %16, %c0_i32_10 : i32
    scf.if %17 {
      %c0_13 = arith.constant 0 : index
      %c0_14 = arith.constant 0 : index
      %c0_15 = arith.constant 0 : index
      %21 = vector.load %arg5[%c0_13, %c0_14, %c0_15] : memref<1x8x96xf32, #tpu.memory_space<vmem>>, vector<1x8x96xf32>
      %22 = vector.shape_cast %14 : vector<1x16x96xf32> to vector<1x2x8x96xf32>
      %cst_16 = arith.constant dense<0.000000e+00> : vector<1x8x96xf32>
      %23 = vector.multi_reduction <add>, %22, %cst_16 [1] : vector<1x2x8x96xf32> to vector<1x8x96xf32>
      %24 = arith.addf %21, %23 : vector<1x8x96xf32>
      %c0_17 = arith.constant 0 : index
      %c0_18 = arith.constant 0 : index
      %c0_19 = arith.constant 0 : index
      %25 = vector.load %arg5[%c0_17, %c0_18, %c0_19] : memref<1x8x96xf32, #tpu.memory_space<vmem>>, vector<1x8x96xf32>
      tpu.vector_store %arg5[%c0_17, %c0_18, %c0_19], %24 {strides = array<i32>} : memref<1x8x96xf32, #tpu.memory_space<vmem>>, vector<1x8x96xf32>,
    } else {
    }
    %c3_i32_11 = arith.constant 3 : i32
    %18 = arith.cmpi eq, %arg1, %c3_i32_11 : i32
    %19 = arith.extui %18 : i1 to i32
    %c0_i32_12 = arith.constant 0 : i32
    %20 = arith.cmpi ne, %19, %c0_i32_12 : i32
    scf.if %20 {
      %21 = tpu.iota {dimensions = array<i32: 1>} : vector<1x16x96xi32>
      %c16_i32 = arith.constant 16 : i32
      %22 = arith.muli %arg1, %c16_i32 : i32
      %23 = vector.broadcast %22 : i32 to vector<1x16x96xi32>
      %24 = arith.addi %23, %21 : vector<1x16x96xi32>
      %c60_i32 = arith.constant 60 : i32
      %25 = vector.broadcast %c60_i32 : i32 to vector<1x16x96xi32>
      %26 = arith.cmpi slt, %24, %25 : vector<1x16x96xi32>
      %cst_13 = arith.constant 0.000000e+00 : f32
      %27 = vector.broadcast %cst_13 : f32 to vector<1x16x96xf32>
      %28 = arith.select %26, %14, %27 : vector<1x16x96xi1>, vector<1x16x96xf32>
      %c0_14 = arith.constant 0 : index
      %c0_15 = arith.constant 0 : index
      %c0_16 = arith.constant 0 : index
      %29 = vector.load %arg5[%c0_14, %c0_15, %c0_16] : memref<1x8x96xf32, #tpu.memory_space<vmem>>, vector<1x8x96xf32>
      %30 = vector.shape_cast %28 : vector<1x16x96xf32> to vector<1x2x8x96xf32>
      %cst_17 = arith.constant dense<0.000000e+00> : vector<1x8x96xf32>
      %31 = vector.multi_reduction <add>, %30, %cst_17 [1] : vector<1x2x8x96xf32> to vector<1x8x96xf32>
      %32 = arith.addf %29, %31 : vector<1x8x96xf32>
      %c0_18 = arith.constant 0 : index
      %c0_19 = arith.constant 0 : index
      %c0_20 = arith.constant 0 : index
      %33 = vector.load %arg5[%c0_18, %c0_19, %c0_20] : memref<1x8x96xf32, #tpu.memory_space<vmem>>, vector<1x8x96xf32>
      tpu.vector_store %arg5[%c0_18, %c0_19, %c0_20], %32 {strides = array<i32>} : memref<1x8x96xf32, #tpu.memory_space<vmem>>, vector<1x8x96xf32>,
    } else {
    }
    return
  }
  func.func @transform_0(%arg0: i32, %arg1: i32) -> (i32, i32, i32) {
    %c0_i32 = arith.constant 0 : i32
    %c0_i32_0 = arith.constant 0 : i32
    return %arg0, %arg1, %c0_i32 : i32, i32, i32
  }
  func.func @transform_1(%arg0: i32, %arg1: i32) -> (i32, i32, i32) {
    %c0_i32 = arith.constant 0 : i32
    %c0_i32_0 = arith.constant 0 : i32
    return %arg0, %arg1, %c0_i32 : i32, i32, i32
  }
  func.func @transform_2(%arg0: i32, %arg1: i32) -> (i32, i32, i32) {
    %c0_i32 = arith.constant 0 : i32
    %c0_i32_0 = arith.constant 0 : i32
    %c0_i32_1 = arith.constant 0 : i32
    return %arg0, %c0_i32, %c0_i32_0 : i32, i32, i32
  }
  func.func @transform_3(%arg0: i32, %arg1: i32) -> (i32, i32, i32) {
    %c0_i32 = arith.constant 0 : i32
    %c0_i32_0 = arith.constant 0 : i32
    %c0_i32_1 = arith.constant 0 : i32
    return %arg0, %c0_i32, %c0_i32_0 : i32, i32, i32
  }
}

</mosaic_0001>

<llo_original>
// kernel: tpu_custom_call.1
$region0: #{tpu_custom_call.1}
  #allocation0 [shape = 'u32[]', space=smem, size = 0x4, offset = 0x4, fixed_abs, tag = 'smem constant byte address 0x4 - core index']
  #allocation1 [shape = 'u32[72,128]{1,0:T(1,128)}', space=vmem, size = 0x9000, scoped, tag = 'internal scratch']
  %s0 = inlined_call_operand.vmem [shape: f32[2,60,96], index: 0, kind: input, shape index: {}]
  %s1 = inlined_call_operand.vmem [shape: f32[2,60,96], index: 1, kind: input, shape index: {}]
  %s2 = inlined_call_operand.vmem [shape: f32[2,1,96], index: 2, kind: input, shape index: {}]
  %s3 = inlined_call_operand.hbm [shape: f32[2,8,96], index: 3, kind: output, shape index: {}]
  %s4 = sld [smem:[#allocation0]]
  $region57: #{tpu_custom_call.1} parent=0
    _
  %s6 = ssub.s32 1, %s4
  %s7 = scalar_select 0, %s6, %s4
  $region1: #{tpu_custom_call.1} parent=0
    #allocation2 [shape = 'u8[8192]{0}', space=vmem, size = 0x2000, scoped, tag = 'output window, operand 0']
    #allocation3 [shape = 's32[2]{0}', space=sflag, size = 0x8, scoped, tag = 'scoped memory for tpu_custom_call.1']
    %8 = vsyncpa [#allocation3], 0
    %s9 = scalar_lea.sflag [#allocation3], 1
    %10 = vsyncpa %s9, 0
    loop: start=0, step=1, limit=10
    $region2: #{tpu_custom_call.1} parent=1 // loop_pre_header
      _
    $region3: #{tpu_custom_call.1} parent=1 // loop_header
      %s12 = sphi 0, %s16
      %p13 = scmp.ge.s32.totalorder %s12, 10
      %s19 = sphi 0, %s31
      %s20 = sphi 0, %s27
      %s21 = sphi 0, %s19
      %s22 = sphi 0, %s20
      %s23 = sphi 0, %s21
      %s24 = sphi 0, %s22
      %s36 = sphi 0, %s38
      %s39 = sphi 0, %s36
      %s40 = sphi 0, %s39
      %s56 = sphi 0, %s40
      %s64 = sphi 0, %s66
      %s67 = sphi 0, %s64
      %s68 = sphi 0, %s67
      %s84 = sphi 0, %s68
      %s90 = sphi 0, %s92
      %s93 = sphi 0, %s90
      %s94 = sphi 0, %s93
      %s110 = sphi 0, %s94
      %s116 = sphi 0, %s118
      %s119 = sphi 0, %s116
      %s120 = sphi 0, %s119
      %s136 = sphi 0, %s120
    $region4: #{tpu_custom_call.1} parent=1 // loop_header_branch
      %15 = sbr.rel (%p13) target = $region8
    $region5: #{tpu_custom_call.1} parent=1 // loop_body
      %s17 = ssub.s32 %s12, 1
      %s18 = ssub.s32 %s12, 2
      %s25 = sadd.s32 1, %s20
      %p26 = scmp.ge.s32.totalorder %s25, 4
      %s27 = scalar_select %p26, 0, %s25
      %s28 = sadd.s32 1, %s19
      %s29 = scalar_select %p26, %s28, %s19
      %p30 = scmp.ge.s32.totalorder %s29, 2
      %s31 = scalar_select %p30, 0, %s29
      %s32 = ssub.s32 %s19, %s31
      %s33 = ssub.s32 %s20, %s27
      %s34 = sor.u32 %s32, %s33
      %p35 = scmp.eq.s32.totalorder %s34, 0
      %s37 = sadd.s32 %s36, 1
      %s38 = scalar_select %p35, %s36, %s37
      %p41 = pneg %p35
      %p42 = scmp.eq.s32.totalorder %s12, 7
      %p43 = por %p41, %p42
      %p44 = scmp.ne.s32.totalorder %s36, %s39
      %p45 = scmp.eq.s32.totalorder %s12, 0
      %p46 = por %p44, %p45
      %p47 = scmp.ne.s32.totalorder %s36, %s39
      %p48 = scmp.eq.s32.totalorder %s17, 7
      %p49 = por %p47, %p48
      %p50 = scmp.ne.s32.totalorder %s39, %s40
      %p51 = scmp.eq.s32.totalorder %s17, 0
      %p52 = por %p50, %p51
      %p53 = scmp.ne.s32.totalorder %s39, %s40
      %p54 = scmp.eq.s32.totalorder %s18, 7
      %p55 = por %p53, %p54
      %p57 = scmp.ne.s32.totalorder %s40, %s56
      %p58 = scmp.eq.s32.totalorder %s18, 0
      %p59 = por %p57, %p58
      %s60 = ssub.s32 %s19, %s31
      %s61 = ssub.s32 %s20, %s27
      %s62 = sor.u32 %s60, %s61
      %p63 = scmp.eq.s32.totalorder %s62, 0
      %s65 = sadd.s32 %s64, 1
      %s66 = scalar_select %p63, %s64, %s65
      %p69 = pneg %p63
      %p70 = scmp.eq.s32.totalorder %s12, 7
      %p71 = por %p69, %p70
      %p72 = scmp.ne.s32.totalorder %s64, %s67
      %p73 = scmp.eq.s32.totalorder %s12, 0
      %p74 = por %p72, %p73
      %p75 = scmp.ne.s32.totalorder %s64, %s67
      %p76 = scmp.eq.s32.totalorder %s17, 7
      %p77 = por %p75, %p76
      %p78 = scmp.ne.s32.totalorder %s67, %s68
      %p79 = scmp.eq.s32.totalorder %s17, 0
      %p80 = por %p78, %p79
      %p81 = scmp.ne.s32.totalorder %s67, %s68
      %p82 = scmp.eq.s32.totalorder %s18, 7
      %p83 = por %p81, %p82
      %p85 = scmp.ne.s32.totalorder %s68, %s84
      %p86 = scmp.eq.s32.totalorder %s18, 0
      %p87 = por %p85, %p86
      %s88 = ssub.s32 %s19, %s31
      %p89 = scmp.eq.s32.totalorder %s88, 0
      %s91 = sadd.s32 %s90, 1
      %s92 = scalar_select %p89, %s90, %s91
      %p95 = pneg %p89
      %p96 = scmp.eq.s32.totalorder %s12, 7
      %p97 = por %p95, %p96
      %p98 = scmp.ne.s32.totalorder %s90, %s93
      %p99 = scmp.eq.s32.totalorder %s12, 0
      %p100 = por %p98, %p99
      %p101 = scmp.ne.s32.totalorder %s90, %s93
      %p102 = scmp.eq.s32.totalorder %s17, 7
      %p103 = por %p101, %p102
      %p104 = scmp.ne.s32.totalorder %s93, %s94
      %p105 = scmp.eq.s32.totalorder %s17, 0
      %p106 = por %p104, %p105
      %p107 = scmp.ne.s32.totalorder %s93, %s94
      %p108 = scmp.eq.s32.totalorder %s18, 7
      %p109 = por %p107, %p108
      %p111 = scmp.ne.s32.totalorder %s94, %s110
      %p112 = scmp.eq.s32.totalorder %s18, 0
      %p113 = por %p111, %p112
      %s114 = ssub.s32 %s19, %s31
      %p115 = scmp.eq.s32.totalorder %s114, 0
      %s117 = sadd.s32 %s116, 1
      %s118 = scalar_select %p115, %s116, %s117
      %p121 = pneg %p115
      %p122 = scmp.eq.s32.totalorder %s12, 7
      %p123 = por %p121, %p122
      %p124 = scmp.ne.s32.totalorder %s116, %s119
      %p125 = scmp.eq.s32.totalorder %s12, 0
      %p126 = por %p124, %p125
      %p127 = scmp.ne.s32.totalorder %s116, %s119
      %p128 = scmp.eq.s32.totalorder %s17, 7
      %p129 = por %p127, %p128
      %p130 = scmp.ne.s32.totalorder %s119, %s120
      %p131 = scmp.eq.s32.totalorder %s17, 0
      %p132 = por %p130, %p131
      %p133 = scmp.ne.s32.totalorder %s119, %s120
      %p134 = scmp.eq.s32.totalorder %s18, 7
      %p135 = por %p133, %p134
      %p137 = scmp.ne.s32.totalorder %s120, %s136
      %p138 = scmp.eq.s32.totalorder %s18, 0
      %p139 = por %p137, %p138
      %p140 = scmp.le.s32.totalorder 1, %s12
      %p141 = scmp.lt.s32.totalorder %s12, 9
      %p142 = pnand %p140, %p141
      %p143 = pneg %p142
      // Predicated region
      $region9: #{tpu_custom_call.1} parent=5 // pred_check
        _
      $region10: #{tpu_custom_call.1} parent=5 // pred_check_branch
        %145 = sbr.rel (%p142) target = $region12
      $region11: #{tpu_custom_call.1} parent=5 // pred_region
        %s146 = ssub.s32 %s12, 1
      $region12: #{tpu_custom_call.1} parent=5 // pred_fallthru
        _
      %p147 = scmp.lt.s32.totalorder %s12, 8
      // Predicated region
      $region13: #{tpu_custom_call.1} parent=5 // pred_check
        %p148 = pneg %p147
      $region14: #{tpu_custom_call.1} parent=5 // pred_check_branch
        %150 = sbr.rel (%p148) target = $region16
      $region15: #{tpu_custom_call.1} parent=5 // pred_region
        // Predicated region
        $region17: #{tpu_custom_call.1} parent=15 // pred_check
          %p151 = pneg %p46
        $region18: #{tpu_custom_call.1} parent=15 // pred_check_branch
          %153 = sbr.rel (%p151) target = $region20
        $region19: #{tpu_custom_call.1} parent=15 // pred_region
          %s154 = smul.u32 2, %s20
          %p155 = scmp.lt.s32.totalorder %s19, 1
          %s156 = scalar_select %p155, %s19, 1
          %p157 = scmp.lt.s32.totalorder %s154, 7
          %s158 = scalar_select %p157, %s154, 7
          %s159 = smul.addr %s156, 8
          %s160 = sadd.s32 %s158, %s159
          %s161 = smul.addr %s160, 8
          %s162 = scalar_lea.vmem %s0, %s161
          %s163 = smul.u32 2, %s20
        $region20: #{tpu_custom_call.1} parent=15 // pred_fallthru
          _
        // Predicated region
        $region21: #{tpu_custom_call.1} parent=15 // pred_check
          %p164 = pneg %p74
        $region22: #{tpu_custom_call.1} parent=15 // pred_check_branch
          %166 = sbr.rel (%p164) target = $region24
        $region23: #{tpu_custom_call.1} parent=15 // pred_region
          %s167 = smul.u32 2, %s20
          %p168 = scmp.lt.s32.totalorder %s19, 1
          %s169 = scalar_select %p168, %s19, 1
          %p170 = scmp.lt.s32.totalorder %s167, 7
          %s171 = scalar_select %p170, %s167, 7
          %s172 = smul.addr %s169, 8
          %s173 = sadd.s32 %s171, %s172
          %s174 = smul.addr %s173, 8
          %s175 = scalar_lea.vmem %s1, %s174
          %s176 = smul.u32 2, %s20
        $region24: #{tpu_custom_call.1} parent=15 // pred_fallthru
          _
        // Predicated region
        $region25: #{tpu_custom_call.1} parent=15 // pred_check
          %p177 = pneg %p100
        $region26: #{tpu_custom_call.1} parent=15 // pred_check_branch
          %179 = sbr.rel (%p177) target = $region28
        $region27: #{tpu_custom_call.1} parent=15 // pred_region
          %p180 = scmp.lt.s32.totalorder %s19, 1
          %s181 = scalar_select %p180, %s19, 1
          %s182 = scalar_lea.vmem %s2, %s181
        $region28: #{tpu_custom_call.1} parent=15 // pred_fallthru
          _
      $region16: #{tpu_custom_call.1} parent=5 // pred_fallthru
        _
      %p183 = scmp.le.s32.totalorder 1, %s12
      %p184 = scmp.lt.s32.totalorder %s12, 9
      %p185 = pnand %p183, %p184
      %p186 = pneg %p185
      // Predicated region
      $region29: #{tpu_custom_call.1} parent=5 // pred_check
        _
      $region30: #{tpu_custom_call.1} parent=5 // pred_check_branch
        %188 = sbr.rel (%p185) target = $region32
      $region31: #{tpu_custom_call.1} parent=5 // pred_region
        %s189 = ssub.s32 %s12, 1
        %s190 = smul.u32 2, %s22
        %p191 = scmp.lt.s32.totalorder %s21, 1
        %s192 = scalar_select %p191, %s21, 1
        %p193 = scmp.lt.s32.totalorder %s190, 7
        %s194 = scalar_select %p193, %s190, 7
        %s195 = smul.addr %s192, 8
        %s196 = sadd.s32 %s194, %s195
        %s197 = smul.addr %s196, 8
        %s198 = scalar_lea.vmem %s0, %s197
        %p199 = pneg %p52
        %p200 = pneg %p49
        %s201 = smul.u32 2, %s22
        %p202 = scmp.lt.s32.totalorder %s21, 1
        %s203 = scalar_select %p202, %s21, 1
        %p204 = scmp.lt.s32.totalorder %s201, 7
        %s205 = scalar_select %p204, %s201, 7
        %s206 = smul.addr %s203, 8
        %s207 = sadd.s32 %s205, %s206
        %s208 = smul.addr %s207, 8
        %s209 = scalar_lea.vmem %s1, %s208
        %p210 = pneg %p80
        %p211 = pneg %p77
        %p212 = scmp.lt.s32.totalorder %s21, 1
        %s213 = scalar_select %p212, %s21, 1
        %s214 = scalar_lea.vmem %s2, %s213
        %p215 = pneg %p106
        %p216 = pneg %p103
        %p217 = pneg %p132
        %p218 = pneg %p129
        %s219 = sand.u32 %s119, 1
        %s220 = scalar_lea.sflag [#allocation3], %s219
        %s221 = sand.u32 %s119, 1
        %s222 = smul.addr %s221, 8
        %s223 = scalar_lea.vmem [#allocation2], %s222
        %s224 = smul.u32 2, %s22
        %p225 = scmp.lt.s32.totalorder %s21, 1
        %s226 = scalar_select %p225, %s21, 1
        %p227 = scmp.lt.s32.totalorder %s224, 7
        %s228 = scalar_select %p227, %s224, 7
        %s229 = smul.addr %s226, 8
        %s230 = sadd.s32 %s228, %s229
        %s231 = smul.addr %s230, 8
        %s232 = scalar_lea.vmem %s0, %s231
        %s233 = smul.u32 2, %s22
        %s234 = smul.u32 2, %s22
        %p235 = scmp.lt.s32.totalorder %s21, 1
        %s236 = scalar_select %p235, %s21, 1
        %p237 = scmp.lt.s32.totalorder %s234, 7
        %s238 = scalar_select %p237, %s234, 7
        %s239 = smul.addr %s236, 8
        %s240 = sadd.s32 %s238, %s239
        %s241 = smul.addr %s240, 8
        %s242 = scalar_lea.vmem %s1, %s241
        %s243 = smul.u32 2, %s22
        %p244 = scmp.lt.s32.totalorder %s21, 1
        %s245 = scalar_select %p244, %s21, 1
        %s246 = scalar_lea.vmem %s2, %s245
        %p247 = scmp.eq.s32.totalorder %s22, 0
        // Predicated region
        $region33: #{tpu_custom_call.1} parent=31 // pred_check
          %p248 = pneg %p247
        $region34: #{tpu_custom_call.1} parent=31 // pred_check_branch
          %250 = sbr.rel (%p248) target = $region36
        $region35: #{tpu_custom_call.1} parent=31 // pred_region
          %vm251 = vcmask 785408
          %252 = vst.msk [vmem:[%s223] sm:$0xff] %vm251, 0.0
        $region36: #{tpu_custom_call.1} parent=31 // pred_fallthru
          _
        %v253 = vld [vmem:[%s232] sm:$0xff]
        %v254 = vld [vmem:[%s232 + $0x8] sm:$0xff]
        %v255 = vld [vmem:[%s242] sm:$0xff]
        %v256 = vld [vmem:[%s242 + $0x8] sm:$0xff]
        %v257 = vsub.f32 %v253, %v255
        %v258 = vsub.f32 %v254, %v256
        %v259 = vmul.f32 %v257, %v257
        %v260 = vmul.f32 %v258, %v258
        %v261 = vld [vmem:[%s246] sm:$0x1]
        %v263 = vperm.slane %v261, 0
        %v265 = vmul.f32 %v259, %v263
        %v266 = vmul.f32 %v260, %v263
        %v267 = vadd.f32 %v265, 1.0
        %v268 = vadd.f32 %v266, 1.0
        %v269 = vrsqrt.pop %v267
        %v270 = vmul.f32 %v269, %v267
        %v271 = vmul.f32 %v270, %v269
        %v272 = vmul.f32 0.5, %v271
        %v273 = vsub.f32 1.5, %v272
        %v274 = vmul.f32 %v269, %v273
        %v275 = vmul.f32 %v267, %v274
        %vm276 = vcmp.eq.f32.partialorder %v267, inf
        %v277 = vsel %vm276, %v267, %v275
        %vm278 = vcmp.eq.f32.partialorder %v267, 0.0
        %v279 = vand.u32 %v267, 2147483648
        %v280 = vsel %vm278, %v279, %v277
        %v281 = vrsqrt.pop %v268
        %v282 = vmul.f32 %v281, %v268
        %v283 = vmul.f32 %v282, %v281
        %v284 = vmul.f32 0.5, %v283
        %v285 = vsub.f32 1.5, %v284
        %v286 = vmul.f32 %v281, %v285
        %v287 = vmul.f32 %v268, %v286
        %vm288 = vcmp.eq.f32.partialorder %v268, inf
        %v289 = vsel %vm288, %v268, %v287
        %vm290 = vcmp.eq.f32.partialorder %v268, 0.0
        %v291 = vand.u32 %v268, 2147483648
        %v292 = vsel %vm290, %v291, %v289
        %v293 = vsub.f32 %v280, 1.0
        %v294 = vsub.f32 %v292, 1.0
        %p295 = scmp.lt.s32.totalorder %s22, 3
        // Predicated region
        $region37: #{tpu_custom_call.1} parent=31 // pred_check
          %p296 = pneg %p295
        $region38: #{tpu_custom_call.1} parent=31 // pred_check_branch
          %298 = sbr.rel (%p296) target = $region40
        $region39: #{tpu_custom_call.1} parent=31 // pred_region
          %v299 = vld [vmem:[%s223] sm:$0xff]
          %vm300 = vcmask 785408
          %v301 = vsel %vm300, %v293, 0.0
          %v302 = vsel %vm300, %v294, 0.0
          %v303 = vadd.f32 %v301, %v302
          %v304 = vadd.f32 %v299, %v303
          %305 = vst.msk [vmem:[%s223] sm:$0xff] %vm300, %v304
        $region40: #{tpu_custom_call.1} parent=31 // pred_fallthru
          _
        %p306 = scmp.eq.s32.totalorder %s22, 3
        // Predicated region
        $region41: #{tpu_custom_call.1} parent=31 // pred_check
          %p307 = pneg %p306
        $region42: #{tpu_custom_call.1} parent=31 // pred_check_branch
          %309 = sbr.rel (%p307) target = $region44
        $region43: #{tpu_custom_call.1} parent=31 // pred_region
          %v310 = vlaneseq
          %v311 = vshrl.u32 %v310, 7
          %v312 = vadd.s32 %v311, 8
          %s313 = smul.u32 %s22, 16
          %v314 = vstv %s313
          %v315 = vadd.s32 %v314, %v311
          %v316 = vadd.s32 %v314, %v312
          %vm317 = vcmp.lt.s32.totalorder %v315, 60
          %vm318 = vcmp.lt.s32.totalorder %v316, 60
          %v319 = vsel %vm317, %v293, 0.0
          %v320 = vsel %vm318, %v294, 0.0
          %v321 = vld [vmem:[%s223] sm:$0xff]
          %vm322 = vcmask 785408
          %v323 = vsel %vm322, %v319, 0.0
          %v324 = vsel %vm322, %v320, 0.0
          %v325 = vadd.f32 %v323, %v324
          %v326 = vadd.f32 %v321, %v325
          %327 = vst.msk [vmem:[%s223] sm:$0xff] %vm322, %v326
        $region44: #{tpu_custom_call.1} parent=31 // pred_fallthru
          _
        %s328 = sand.u32 %s119, 1
        %s329 = scalar_lea.sflag [#allocation3], %s328
        %s330 = sand.u32 %s119, 1
        %s331 = smul.addr %s330, 8
        %s332 = scalar_lea.vmem [#allocation2], %s331
        // Predicated region
        $region45: #{tpu_custom_call.1} parent=31 // pred_check
          %p333 = pneg %p129
        $region46: #{tpu_custom_call.1} parent=31 // pred_check_branch
          %335 = sbr.rel (%p333) target = $region48
        $region47: #{tpu_custom_call.1} parent=31 // pred_region
          %337 = vsyncadd %s329, 0
          %s338 = smul.addr %s21, 8
          %s339 = scalar_lea.hbm %s3, %s338
          %s341 = sshll.u32 %s332, 4
          %s342 = int_to_ptr.vmem [resolvable:$true] %s341
          %s343 = sshll.u32 %s339, 4
          %s344 = int_to_ptr.hbm [resolvable:$true] %s343
          %346 = dma.vmem_to_hbm [thread:$0]  %s342, 128, %s344, %s329
        $region48: #{tpu_custom_call.1} parent=31 // pred_fallthru
          _
      $region32: #{tpu_custom_call.1} parent=5 // pred_fallthru
        _
      %p347 = scmp.le.s32.totalorder 2, %s12
      // Predicated region
      $region49: #{tpu_custom_call.1} parent=5 // pred_check
        %p348 = pneg %p347
      $region50: #{tpu_custom_call.1} parent=5 // pred_check_branch
        %350 = sbr.rel (%p348) target = $region52
      $region51: #{tpu_custom_call.1} parent=5 // pred_region
        %s351 = ssub.s32 %s12, 2
        // Predicated region
        $region53: #{tpu_custom_call.1} parent=51 // pred_check
          %p352 = pneg %p135
        $region54: #{tpu_custom_call.1} parent=51 // pred_check_branch
          %354 = sbr.rel (%p352) target = $region56
        $region55: #{tpu_custom_call.1} parent=51 // pred_region
          %s355 = sand.u32 %s120, 1
          %s356 = scalar_lea.sflag [#allocation3], %s355
          %s357 = sand.u32 %s120, 1
          %s358 = smul.addr %s357, 8
          %s359 = scalar_lea.vmem [#allocation2], %s358
          %361 = dma.done %s356, 128
        $region56: #{tpu_custom_call.1} parent=51 // pred_fallthru
          _
      $region52: #{tpu_custom_call.1} parent=5 // pred_fallthru
        _
    $region6: #{tpu_custom_call.1} parent=1 // loop_footer
      %s16 = sadd.s32 1, %s12
    $region7: #{tpu_custom_call.1} parent=1 // loop_footer_branch
      %11 = sbr.rel target = $region3
    $region8: #{tpu_custom_call.1} parent=1 // loop_exit
      _
    %362 = vsyncpa [#allocation3], 1
    %s363 = scalar_lea.sflag [#allocation3], 1
    %364 = vsyncpa %s363, 1

</llo_original>
